<compile_context>
chip_gen: v5e
topology: v5e:2x2
jax: 0.10.0
libtpu: 0.0.40
codegen_flags: <defaults>
</compile_context>

<pallas_src>
import functools

import jax
import jax.numpy as jnp
from jax.experimental import pallas as pl
from jax.experimental.pallas import tpu as pltpu


def _warp_mse_kernel(img_ref, tgt_ref, crd_ref, out_ref, *, C, H, W, tp):
    """One (batch, pixel-tile) step: warp `tp` output pixels of one image and
    write the squared-error partial sum for that tile."""
    img = img_ref[0].astype(jnp.float32)      # (C*W, H)  full source image
    tgt = tgt_ref[0].astype(jnp.float32)      # (C, tp)   target tile
    crd = crd_ref[0].astype(jnp.float32)      # (2, tp)   sample coords tile

    sx = crd[0:1, :]                          # (1, tp) sample x
    sy = crd[1:2, :]                          # (1, tp) sample y
    fx = jnp.floor(sx)
    fy = jnp.floor(sy)
    dx = sx - fx
    dy = sy - fy
    fxi = fx.astype(jnp.int32)
    fyi = fy.astype(jnp.int32)

    # Separable bilinear weights (2-D: spatial axis on sublanes, pixel on
    # lanes).  Out-of-bounds rows/cols never match any iota value -> weight 0,
    # reproducing grid_sample's zeros padding exactly.
    qy = jax.lax.broadcasted_iota(jnp.int32, (H, tp), 0)
    qx = jax.lax.broadcasted_iota(jnp.int32, (W, tp), 0)
    wy = jnp.where(qy == fyi, 1.0 - dy, jnp.where(qy == fyi + 1, dy, 0.0))
    wx = jnp.where(qx == fxi, 1.0 - dx, jnp.where(qx == fxi + 1, dx, 0.0))

    # Stage 1 (MXU): contract the row axis for all (channel, column) pairs.
    a = jnp.dot(img, wy, preferred_element_type=jnp.float32)       # (C*W, tp)

    # Stage 2 (VPU multiply + sublane reduce): contract the column axis.
    warped = jnp.sum(a.reshape(C, W, tp) * wx[None, :, :], axis=1)  # (C, tp)

    diff = warped - tgt
    out_ref[0, 0] = jnp.sum(diff * diff, keepdims=True)             # (1, 1)


def _choose_tile(hwp, c, w, vmem_limit):
    """Largest MXU-friendly pixel tile (512/256/128) whose stage-1 (C*W, tp)
    buffer fits a conservative slice of the VMEM budget."""
    budget = max(vmem_limit // 8, 1 << 20)          # bytes for the (C*W, tp) block
    cap = (budget // (max(c * w, 1) * 4)) // 128 * 128
    cap = max(128, min(512, cap))
    for cand in (512, 256, 128):
        if cand <= cap and hwp % cand == 0:
            return cand
    return 128


def backward_warp_loss(inp, tgt, flow):
    """inp/tgt: (B, C, H, W) float32 (NCHW), flow: (B, 2, H, W) float32."""
    inp = inp.astype(jnp.float32)
    tgt = tgt.astype(jnp.float32)
    flow = flow.astype(jnp.float32)

    B, C, H, W = inp.shape
    HW = H * W
    HWp = ((HW + 127) // 128) * 128                 # lane-aligned pixel count
    pad = HWp - HW

    # Device-aware VMEM budget (v5e/v6e: 128 MiB physical; v7x: 64 MiB/TC).
    try:
        vmem_cap = pltpu.get_tpu_info().vmem_capacity_bytes
    except Exception:  # conservative fallback if query is unavailable
        vmem_cap = 64 * 1024 * 1024
    vmem_limit = int(min(vmem_cap * 3 // 4, 96 * 1024 * 1024))

    tp = _choose_tile(HWp, C, W, vmem_limit)
    np_tiles = HWp // tp

    # Image laid out as (C*W, H): MXU contracts rows (H) with M = C*W.
    img_cwh = inp.transpose(0, 1, 3, 2).reshape(B, C * W, H)

    # Absolute sample coordinates (base grid + flow).  Padded pixels get a far
    # out-of-bounds coordinate -> zero bilinear weight -> zero contribution.
    ys, xs = jnp.meshgrid(jnp.arange(H, dtype=jnp.float32),
                          jnp.arange(W, dtype=jnp.float32), indexing="ij")
    coords = jnp.stack([xs[None] + flow[:, 0], ys[None] + flow[:, 1]], axis=1)
    coords = coords.reshape(B, 2, HW)
    coords = jnp.pad(coords, ((0, 0), (0, 0), (0, pad)),
                     constant_values=jnp.float32(-1e4))
    tgt2 = jnp.pad(tgt.reshape(B, C, HW), ((0, 0), (0, 0), (0, pad)))

    kernel = functools.partial(_warp_mse_kernel, C=C, H=H, W=W, tp=tp)

    partials = pl.pallas_call(
        kernel,
        out_shape=jax.ShapeDtypeStruct((B, np_tiles, 1, 1), jnp.float32),
        grid_spec=pltpu.PrefetchScalarGridSpec(
            num_scalar_prefetch=0,
            grid=(B, np_tiles),                       # p innermost: image block
            in_specs=[                                # index is constant -> no re-DMA
                pl.BlockSpec((1, C * W, H), lambda b, p: (b, 0, 0)),  # image
                pl.BlockSpec((1, C, tp), lambda b, p: (b, 0, p)),     # target
                pl.BlockSpec((1, 2, tp), lambda b, p: (b, 0, p)),     # coords
            ],
            out_specs=pl.BlockSpec((1, 1, 1, 1), lambda b, p: (b, p, 0, 0)),
        ),
        compiler_params=pltpu.CompilerParams(
            dimension_semantics=("parallel", "parallel"),
            vmem_limit_bytes=vmem_limit),
    )(img_cwh, tgt2, coords)

    return jnp.sum(partials) / float(B * C * H * W)


def _reference_loss(inp, tgt, flow):
    """Pure-JAX reference (explicit gather-based bilinear warp + MSE)."""
    B, C, H, W = inp.shape
    ys, xs = jnp.meshgrid(jnp.arange(H, dtype=jnp.float32),
                          jnp.arange(W, dtype=jnp.float32), indexing="ij")
    sx = xs[None] + flow[:, 0]
    sy = ys[None] + flow[:, 1]
    fx = jnp.floor(sx)
    fy = jnp.floor(sy)
    dx = sx - fx
    dy = sy - fy
    fxi = fx.astype(jnp.int32)
    fyi = fy.astype(jnp.int32)

    def gather(yi, xi):
        valid = ((yi >= 0) & (yi < H) & (xi >= 0) & (xi < W)).astype(inp.dtype)
        yc = jnp.clip(yi, 0, H - 1)
        xc = jnp.clip(xi, 0, W - 1)
        v = jax.vmap(lambda img, y, x: img[:, y, x])(inp, yc, xc)  # (B,C,H,W)
        return v * valid[:, None]

    w00 = ((1 - dy) * (1 - dx))[:, None]
    w01 = ((1 - dy) * dx)[:, None]
    w10 = (dy * (1 - dx))[:, None]
    w11 = (dy * dx)[:, None]
    warped = (gather(fyi, fxi) * w00 + gather(fyi, fxi + 1) * w01 +
              gather(fyi + 1, fxi) * w10 + gather(fyi + 1, fxi + 1) * w11)
    return jnp.mean((warped - tgt) ** 2)


if __name__ == "__main__":
    key = jax.random.PRNGKey(0)
    k1, k2, k3 = jax.random.split(key, 3)
    B, C, H, W = 2, 4, 16, 16
    inp = jax.random.normal(k1, (B, C, H, W), jnp.float32)
    tgt = jax.random.normal(k2, (B, C, H, W), jnp.float32)
    # Flow of a few pixels' magnitude: fractional offsets + some out-of-bounds.
    flow = 3.0 * jax.random.normal(k3, (B, 2, H, W), jnp.float32)

    loss = backward_warp_loss(inp, tgt, flow)
    jax.block_until_ready(loss)
    ref = _reference_loss(inp, tgt, flow)
    assert jnp.allclose(loss, ref, rtol=1e-3, atol=1e-5), (loss, ref)

    # Second shape exercises the multi-p-tile path (HW=1024 -> 2 tiles of 512)
    # and an odd channel count.
    k4, k5, k6 = jax.random.split(jax.random.PRNGKey(1), 3)
    B2, C2, H2, W2 = 2, 3, 32, 32
    inp_b = jax.random.normal(k4, (B2, C2, H2, W2), jnp.float32)
    tgt_b = jax.random.normal(k5, (B2, C2, H2, W2), jnp.float32)
    flow_b = 3.0 * jax.random.normal(k6, (B2, 2, H2, W2), jnp.float32)
    loss_b = backward_warp_loss(inp_b, tgt_b, flow_b)
    jax.block_until_ready(loss_b)
    ref_b = _reference_loss(inp_b, tgt_b, flow_b)
    assert jnp.allclose(loss_b, ref_b, rtol=1e-3, atol=1e-5), (loss_b, ref_b)

    print("KERNEL_OK")
</pallas_src>

<mosaic_0001>
module attributes {stable_mosaic.version = 11 : i64} {
  func.func @_warp_mse_kernel(%arg0: i32, %arg1: i32, %arg2: memref<1x64x16xf32, #tpu.memory_space<vmem>>, %arg3: memref<1x4x256xf32, #tpu.memory_space<vmem>>, %arg4: memref<1x2x256xf32, #tpu.memory_space<vmem>>, %arg5: memref<1x1x1x1xf32, #tpu.memory_space<vmem>>) attributes {dimension_semantics = [#tpu.dimension_semantics<parallel>, #tpu.dimension_semantics<parallel>], iteration_bounds = array<i64: 2, 1>, scalar_prefetch = 0 : i64, scratch_operands = 0 : i64, tpu.core_type = #tpu.core_type<tc>, window_params = [{transform_indices = @transform_0, window_bounds = array<i64: 1, 64, 16>}, {transform_indices = @transform_1, window_bounds = array<i64: 1, 4, 256>}, {transform_indices = @transform_2, window_bounds = array<i64: 1, 2, 256>}, {transform_indices = @transform_3, window_bounds = array<i64: 1, 1, 1, 1>}]} {
    %c0 = arith.constant 0 : index
    %c0_0 = arith.constant 0 : index
    %c0_1 = arith.constant 0 : index
    %0 = vector.load %arg2[%c0, %c0_0, %c0_1] : memref<1x64x16xf32, #tpu.memory_space<vmem>>, vector<1x64x16xf32>
    %1 = vector.shape_cast %0 : vector<1x64x16xf32> to vector<64x16xf32>
    %c0_2 = arith.constant 0 : index
    %c0_3 = arith.constant 0 : index
    %c0_4 = arith.constant 0 : index
    %2 = vector.load %arg3[%c0_2, %c0_3, %c0_4] : memref<1x4x256xf32, #tpu.memory_space<vmem>>, vector<1x4x256xf32>
    %3 = vector.shape_cast %2 : vector<1x4x256xf32> to vector<4x256xf32>
    %c0_5 = arith.constant 0 : index
    %c0_6 = arith.constant 0 : index
    %c0_7 = arith.constant 0 : index
    %4 = vector.load %arg4[%c0_5, %c0_6, %c0_7] : memref<1x2x256xf32, #tpu.memory_space<vmem>>, vector<1x2x256xf32>
    %5 = vector.shape_cast %4 : vector<1x2x256xf32> to vector<2x256xf32>
    %6 = vector.extract_strided_slice %5 {offsets = [0, 0], sizes = [1, 256], strides = [1, 1]} : vector<2x256xf32> to vector<1x256xf32>
    %7 = vector.extract_strided_slice %5 {offsets = [1, 0], sizes = [1, 256], strides = [1, 1]} : vector<2x256xf32> to vector<1x256xf32>
    %8 = math.floor %6 : vector<1x256xf32>
    %9 = math.floor %7 : vector<1x256xf32>
    %10 = arith.subf %6, %8 : vector<1x256xf32>
    %11 = arith.subf %7, %9 : vector<1x256xf32>
    %12 = arith.fptosi %8 : vector<1x256xf32> to vector<1x256xi32>
    %13 = arith.fptosi %9 : vector<1x256xf32> to vector<1x256xi32>
    %14 = tpu.iota {dimensions = array<i32: 0>} : vector<16x256xi32>
    %15 = tpu.iota {dimensions = array<i32: 0>} : vector<16x256xi32>
    %16 = vector.broadcast %13 : vector<1x256xi32> to vector<16x256xi32>
    %17 = arith.cmpi eq, %14, %16 : vector<16x256xi32>
    %cst = arith.constant 1.000000e+00 : f32
    %18 = vector.broadcast %cst : f32 to vector<1x256xf32>
    %19 = arith.subf %18, %11 : vector<1x256xf32>
    %c1_i32 = arith.constant 1 : i32
    %20 = vector.broadcast %c1_i32 : i32 to vector<1x256xi32>
    %21 = arith.addi %13, %20 : vector<1x256xi32>
    %22 = vector.broadcast %21 : vector<1x256xi32> to vector<16x256xi32>
    %23 = arith.cmpi eq, %14, %22 : vector<16x256xi32>
    %cst_8 = arith.constant 0.000000e+00 : f32
    %24 = vector.shape_cast %11 : vector<1x256xf32> to vector<1x256xf32>
    %25 = vector.broadcast %24 : vector<1x256xf32> to vector<16x256xf32>
    %26 = vector.broadcast %cst_8 : f32 to vector<16x256xf32>
    %27 = arith.select %23, %25, %26 : vector<16x256xi1>, vector<16x256xf32>
    %28 = vector.shape_cast %19 : vector<1x256xf32> to vector<1x256xf32>
    %29 = vector.broadcast %28 : vector<1x256xf32> to vector<16x256xf32>
    %30 = arith.select %17, %29, %27 : vector<16x256xi1>, vector<16x256xf32>
    %31 = vector.broadcast %12 : vector<1x256xi32> to vector<16x256xi32>
    %32 = arith.cmpi eq, %15, %31 : vector<16x256xi32>
    %cst_9 = arith.constant 1.000000e+00 : f32
    %33 = vector.broadcast %cst_9 : f32 to vector<1x256xf32>
    %34 = arith.subf %33, %10 : vector<1x256xf32>
    %c1_i32_10 = arith.constant 1 : i32
    %35 = vector.broadcast %c1_i32_10 : i32 to vector<1x256xi32>
    %36 = arith.addi %12, %35 : vector<1x256xi32>
    %37 = vector.broadcast %36 : vector<1x256xi32> to vector<16x256xi32>
    %38 = arith.cmpi eq, %15, %37 : vector<16x256xi32>
    %cst_11 = arith.constant 0.000000e+00 : f32
    %39 = vector.shape_cast %10 : vector<1x256xf32> to vector<1x256xf32>
    %40 = vector.broadcast %39 : vector<1x256xf32> to vector<16x256xf32>
    %41 = vector.broadcast %cst_11 : f32 to vector<16x256xf32>
    %42 = arith.select %38, %40, %41 : vector<16x256xi1>, vector<16x256xf32>
    %43 = vector.shape_cast %34 : vector<1x256xf32> to vector<1x256xf32>
    %44 = vector.broadcast %43 : vector<1x256xf32> to vector<16x256xf32>
    %45 = arith.select %32, %44, %42 : vector<16x256xi1>, vector<16x256xf32>
    %cst_12 = arith.constant dense<0.000000e+00> : vector<64x256xf32>
    %46 = tpu.matmul %1, %30, %cst_12 {dimension_numbers = #tpu.dot_dimension_numbers<[1], [0], [0], [1], [0, 0, 1, 1], [], []>} : vector<64x16xf32>, vector<16x256xf32>, vector<64x256xf32> -> vector<64x256xf32>
    %47 = vector.shape_cast %46 : vector<64x256xf32> to vector<4x16x256xf32>
    %48 = vector.shape_cast %45 : vector<16x256xf32> to vector<1x16x256xf32>
    %49 = vector.broadcast %48 : vector<1x16x256xf32> to vector<4x16x256xf32>
    %50 = arith.mulf %47, %49 : vector<4x16x256xf32>
    %cst_13 = arith.constant dense<0.000000e+00> : vector<4x256xf32>
    %51 = vector.multi_reduction <add>, %50, %cst_13 [1] : vector<4x16x256xf32> to vector<4x256xf32>
    %52 = arith.subf %51, %3 : vector<4x256xf32>
    %53 = arith.mulf %52, %52 : vector<4x256xf32>
    %54 = vector.shape_cast %53 : vector<4x256xf32> to vector<1x4x256xf32>
    %cst_14 = arith.constant dense<0.000000e+00> : vector<1xf32>
    %55 = vector.multi_reduction <add>, %54, %cst_14 [1, 2] : vector<1x4x256xf32> to vector<1xf32>
    %56 = vector.shape_cast %55 : vector<1xf32> to vector<1x1x1xf32>
    %57 = vector.extract %56[0, 0, 0] : f32 from vector<1x1x1xf32>
    %58 = vector.broadcast %57 : f32 to vector<1x1xf32>
    %c0_15 = arith.constant 0 : index
    %c0_16 = arith.constant 0 : index
    %c0_17 = arith.constant 0 : index
    %c0_18 = arith.constant 0 : index
    %59 = vector.load %arg5[%c0_15, %c0_16, %c0_17, %c0_18] : memref<1x1x1x1xf32, #tpu.memory_space<vmem>>, vector<1x1x1x1xf32>
    %60 = vector.shape_cast %59 : vector<1x1x1x1xf32> to vector<1x1xf32>
    %61 = vector.shape_cast %58 : vector<1x1xf32> to vector<1x1x1x1xf32>
    tpu.vector_store %arg5[%c0_15, %c0_16, %c0_17, %c0_18], %61 {strides = array<i32>} : memref<1x1x1x1xf32, #tpu.memory_space<vmem>>, vector<1x1x1x1xf32>,
    return
  }
  func.func @transform_0(%arg0: i32, %arg1: i32) -> (i32, i32, i32) {
    %c0_i32 = arith.constant 0 : i32
    %c0_i32_0 = arith.constant 0 : i32
    %c0_i32_1 = arith.constant 0 : i32
    return %arg0, %c0_i32, %c0_i32_0 : i32, i32, i32
  }
  func.func @transform_1(%arg0: i32, %arg1: i32) -> (i32, i32, i32) {
    %c0_i32 = arith.constant 0 : i32
    %c0_i32_0 = arith.constant 0 : i32
    return %arg0, %c0_i32, %arg1 : i32, i32, i32
  }
  func.func @transform_2(%arg0: i32, %arg1: i32) -> (i32, i32, i32) {
    %c0_i32 = arith.constant 0 : i32
    %c0_i32_0 = arith.constant 0 : i32
    return %arg0, %c0_i32, %arg1 : i32, i32, i32
  }
  func.func @transform_3(%arg0: i32, %arg1: i32) -> (i32, i32, i32, i32) {
    %c0_i32 = arith.constant 0 : i32
    %c0_i32_0 = arith.constant 0 : i32
    %c0_i32_1 = arith.constant 0 : i32
    return %arg0, %arg1, %c0_i32, %c0_i32_0 : i32, i32, i32, i32
  }
}

</mosaic_0001>

<llo_original>
// kernel: tpu_custom_call.1
$region0: #{tpu_custom_call.1}
  #allocation0 [shape = 'u32[]', space=smem, size = 0x4, offset = 0x4, fixed_abs, tag = 'smem constant byte address 0x4 - core index']
  #allocation1 [shape = 'u32[72,128]{1,0:T(1,128)}', space=vmem, size = 0x9000, scoped, tag = 'internal scratch']
  %s0 = inlined_call_operand.vmem [shape: f32[2,64,16], index: 0, kind: input, shape index: {}]
  %s1 = inlined_call_operand.vmem [shape: f32[2,4,256], index: 1, kind: input, shape index: {}]
  %s2 = inlined_call_operand.vmem [shape: f32[2,2,256], index: 2, kind: input, shape index: {}]
  %s3 = inlined_call_operand.vmem [shape: f32[2,1,1,1], index: 3, kind: output, shape index: {}]
  %s4 = sld [smem:[#allocation0]]
  $region45: #{tpu_custom_call.1} parent=0
    _
  %s6 = ssub.s32 1, %s4
  %s7 = scalar_select 0, %s6, %s4
  loop: start=0, step=1, limit=4
  $region2: #{tpu_custom_call.1} parent=0 // loop_pre_header
    _
  $region3: #{tpu_custom_call.1} parent=0 // loop_header
    %s9 = sphi 0, %s13
    %p10 = scmp.ge.s32.totalorder %s9, 4
    %s16 = sphi 0, %s28
    %s17 = sphi 0, %s24
    %s18 = sphi 0, %s16
    %s19 = sphi 0, %s17
    %s20 = sphi 0, %s18
    %s21 = sphi 0, %s19
    %s31 = sphi 0, %s33
    %s34 = sphi 0, %s31
    %s35 = sphi 0, %s34
    %s51 = sphi 0, %s35
    %s59 = sphi 0, %s61
    %s62 = sphi 0, %s59
    %s63 = sphi 0, %s62
    %s79 = sphi 0, %s63
    %s87 = sphi 0, %s89
    %s90 = sphi 0, %s87
    %s91 = sphi 0, %s90
    %s107 = sphi 0, %s91
    %s115 = sphi 0, %s117
    %s118 = sphi 0, %s115
    %s119 = sphi 0, %s118
    %s135 = sphi 0, %s119
  $region4: #{tpu_custom_call.1} parent=0 // loop_header_branch
    %12 = sbr.rel (%p10) target = $region8
  $region5: #{tpu_custom_call.1} parent=0 // loop_body
    %s14 = ssub.s32 %s9, 1
    %s15 = ssub.s32 %s9, 2
    %s22 = sadd.s32 1, %s17
    %p23 = scmp.ge.s32.totalorder %s22, 1
    %s24 = scalar_select %p23, 0, %s22
    %s25 = sadd.s32 1, %s16
    %s26 = scalar_select %p23, %s25, %s16
    %p27 = scmp.ge.s32.totalorder %s26, 2
    %s28 = scalar_select %p27, 0, %s26
    %s29 = ssub.s32 %s16, %s28
    %p30 = scmp.eq.s32.totalorder %s29, 0
    %s32 = sadd.s32 %s31, 1
    %s33 = scalar_select %p30, %s31, %s32
    %p36 = pneg %p30
    %p37 = scmp.eq.s32.totalorder %s9, 1
    %p38 = por %p36, %p37
    %p39 = scmp.ne.s32.totalorder %s31, %s34
    %p40 = scmp.eq.s32.totalorder %s9, 0
    %p41 = por %p39, %p40
    %p42 = scmp.ne.s32.totalorder %s31, %s34
    %p43 = scmp.eq.s32.totalorder %s14, 1
    %p44 = por %p42, %p43
    %p45 = scmp.ne.s32.totalorder %s34, %s35
    %p46 = scmp.eq.s32.totalorder %s14, 0
    %p47 = por %p45, %p46
    %p48 = scmp.ne.s32.totalorder %s34, %s35
    %p49 = scmp.eq.s32.totalorder %s15, 1
    %p50 = por %p48, %p49
    %p52 = scmp.ne.s32.totalorder %s35, %s51
    %p53 = scmp.eq.s32.totalorder %s15, 0
    %p54 = por %p52, %p53
    %s55 = ssub.s32 %s16, %s28
    %s56 = ssub.s32 %s17, %s24
    %s57 = sor.u32 %s55, %s56
    %p58 = scmp.eq.s32.totalorder %s57, 0
    %s60 = sadd.s32 %s59, 1
    %s61 = scalar_select %p58, %s59, %s60
    %p64 = pneg %p58
    %p65 = scmp.eq.s32.totalorder %s9, 1
    %p66 = por %p64, %p65
    %p67 = scmp.ne.s32.totalorder %s59, %s62
    %p68 = scmp.eq.s32.totalorder %s9, 0
    %p69 = por %p67, %p68
    %p70 = scmp.ne.s32.totalorder %s59, %s62
    %p71 = scmp.eq.s32.totalorder %s14, 1
    %p72 = por %p70, %p71
    %p73 = scmp.ne.s32.totalorder %s62, %s63
    %p74 = scmp.eq.s32.totalorder %s14, 0
    %p75 = por %p73, %p74
    %p76 = scmp.ne.s32.totalorder %s62, %s63
    %p77 = scmp.eq.s32.totalorder %s15, 1
    %p78 = por %p76, %p77
    %p80 = scmp.ne.s32.totalorder %s63, %s79
    %p81 = scmp.eq.s32.totalorder %s15, 0
    %p82 = por %p80, %p81
    %s83 = ssub.s32 %s16, %s28
    %s84 = ssub.s32 %s17, %s24
    %s85 = sor.u32 %s83, %s84
    %p86 = scmp.eq.s32.totalorder %s85, 0
    %s88 = sadd.s32 %s87, 1
    %s89 = scalar_select %p86, %s87, %s88
    %p92 = pneg %p86
    %p93 = scmp.eq.s32.totalorder %s9, 1
    %p94 = por %p92, %p93
    %p95 = scmp.ne.s32.totalorder %s87, %s90
    %p96 = scmp.eq.s32.totalorder %s9, 0
    %p97 = por %p95, %p96
    %p98 = scmp.ne.s32.totalorder %s87, %s90
    %p99 = scmp.eq.s32.totalorder %s14, 1
    %p100 = por %p98, %p99
    %p101 = scmp.ne.s32.totalorder %s90, %s91
    %p102 = scmp.eq.s32.totalorder %s14, 0
    %p103 = por %p101, %p102
    %p104 = scmp.ne.s32.totalorder %s90, %s91
    %p105 = scmp.eq.s32.totalorder %s15, 1
    %p106 = por %p104, %p105
    %p108 = scmp.ne.s32.totalorder %s91, %s107
    %p109 = scmp.eq.s32.totalorder %s15, 0
    %p110 = por %p108, %p109
    %s111 = ssub.s32 %s16, %s28
    %s112 = ssub.s32 %s17, %s24
    %s113 = sor.u32 %s111, %s112
    %p114 = scmp.eq.s32.totalorder %s113, 0
    %s116 = sadd.s32 %s115, 1
    %s117 = scalar_select %p114, %s115, %s116
    %p120 = pneg %p114
    %p121 = scmp.eq.s32.totalorder %s9, 1
    %p122 = por %p120, %p121
    %p123 = scmp.ne.s32.totalorder %s115, %s118
    %p124 = scmp.eq.s32.totalorder %s9, 0
    %p125 = por %p123, %p124
    %p126 = scmp.ne.s32.totalorder %s115, %s118
    %p127 = scmp.eq.s32.totalorder %s14, 1
    %p128 = por %p126, %p127
    %p129 = scmp.ne.s32.totalorder %s118, %s119
    %p130 = scmp.eq.s32.totalorder %s14, 0
    %p131 = por %p129, %p130
    %p132 = scmp.ne.s32.totalorder %s118, %s119
    %p133 = scmp.eq.s32.totalorder %s15, 1
    %p134 = por %p132, %p133
    %p136 = scmp.ne.s32.totalorder %s119, %s135
    %p137 = scmp.eq.s32.totalorder %s15, 0
    %p138 = por %p136, %p137
    %p139 = scmp.le.s32.totalorder 1, %s9
    %p140 = scmp.lt.s32.totalorder %s9, 3
    %p141 = pnand %p139, %p140
    %p142 = pneg %p141
    // Predicated region
    $region9: #{tpu_custom_call.1} parent=5 // pred_check
      _
    $region10: #{tpu_custom_call.1} parent=5 // pred_check_branch
      %144 = sbr.rel (%p141) target = $region12
    $region11: #{tpu_custom_call.1} parent=5 // pred_region
      %s145 = ssub.s32 %s9, 1
    $region12: #{tpu_custom_call.1} parent=5 // pred_fallthru
      _
    %p146 = scmp.lt.s32.totalorder %s9, 2
    // Predicated region
    $region13: #{tpu_custom_call.1} parent=5 // pred_check
      %p147 = pneg %p146
    $region14: #{tpu_custom_call.1} parent=5 // pred_check_branch
      %149 = sbr.rel (%p147) target = $region16
    $region15: #{tpu_custom_call.1} parent=5 // pred_region
      // Predicated region
      $region17: #{tpu_custom_call.1} parent=15 // pred_check
        %p150 = pneg %p41
      $region18: #{tpu_custom_call.1} parent=15 // pred_check_branch
        %152 = sbr.rel (%p150) target = $region20
      $region19: #{tpu_custom_call.1} parent=15 // pred_region
        %p153 = scmp.lt.s32.totalorder %s16, 1
        %s154 = scalar_select %p153, %s16, 1
        %s155 = smul.addr %s154, 8
        %s156 = smul.addr %s155, 8
        %s157 = scalar_lea.vmem %s0, %s156
      $region20: #{tpu_custom_call.1} parent=15 // pred_fallthru
        _
      // Predicated region
      $region21: #{tpu_custom_call.1} parent=15 // pred_check
        %p158 = pneg %p69
      $region22: #{tpu_custom_call.1} parent=15 // pred_check_branch
        %160 = sbr.rel (%p158) target = $region24
      $region23: #{tpu_custom_call.1} parent=15 // pred_region
        %s161 = smul.u32 2, %s17
        %p162 = scmp.lt.s32.totalorder %s16, 1
        %s163 = scalar_select %p162, %s16, 1
        %p164 = scmp.lt.s32.totalorder %s161, 1
        %s165 = scalar_select %p164, %s161, 1
        %s166 = smul.addr %s163, 2
        %s167 = sadd.s32 %s165, %s166
        %s168 = smul.addr %s167, 4
        %s169 = scalar_lea.vmem %s1, %s168
        %s170 = smul.u32 2, %s17
      $region24: #{tpu_custom_call.1} parent=15 // pred_fallthru
        _
      // Predicated region
      $region25: #{tpu_custom_call.1} parent=15 // pred_check
        %p171 = pneg %p97
      $region26: #{tpu_custom_call.1} parent=15 // pred_check_branch
        %173 = sbr.rel (%p171) target = $region28
      $region27: #{tpu_custom_call.1} parent=15 // pred_region
        %s174 = smul.u32 2, %s17
        %p175 = scmp.lt.s32.totalorder %s16, 1
        %s176 = scalar_select %p175, %s16, 1
        %p177 = scmp.lt.s32.totalorder %s174, 1
        %s178 = scalar_select %p177, %s174, 1
        %s179 = smul.addr %s176, 2
        %s180 = sadd.s32 %s178, %s179
        %s181 = smul.addr %s180, 2
        %s182 = scalar_lea.vmem %s2, %s181
        %s183 = smul.u32 2, %s17
      $region28: #{tpu_custom_call.1} parent=15 // pred_fallthru
        _
    $region16: #{tpu_custom_call.1} parent=5 // pred_fallthru
      _
    %p184 = scmp.le.s32.totalorder 1, %s9
    %p185 = scmp.lt.s32.totalorder %s9, 3
    %p186 = pnand %p184, %p185
    %p187 = pneg %p186
    // Predicated region
    $region29: #{tpu_custom_call.1} parent=5 // pred_check
      _
    $region30: #{tpu_custom_call.1} parent=5 // pred_check_branch
      %189 = sbr.rel (%p186) target = $region32
    $region31: #{tpu_custom_call.1} parent=5 // pred_region
      %s190 = ssub.s32 %s9, 1
      %p191 = scmp.lt.s32.totalorder %s18, 1
      %s192 = scalar_select %p191, %s18, 1
      %s193 = smul.addr %s192, 8
      %s194 = smul.addr %s193, 8
      %s195 = scalar_lea.vmem %s0, %s194
      %p196 = pneg %p47
      %p197 = pneg %p44
      %s198 = smul.u32 2, %s19
      %p199 = scmp.lt.s32.totalorder %s18, 1
      %s200 = scalar_select %p199, %s18, 1
      %p201 = scmp.lt.s32.totalorder %s198, 1
      %s202 = scalar_select %p201, %s198, 1
      %s203 = smul.addr %s200, 2
      %s204 = sadd.s32 %s202, %s203
      %s205 = smul.addr %s204, 4
      %s206 = scalar_lea.vmem %s1, %s205
      %p207 = pneg %p75
      %p208 = pneg %p72
      %s209 = smul.u32 2, %s19
      %p210 = scmp.lt.s32.totalorder %s18, 1
      %s211 = scalar_select %p210, %s18, 1
      %p212 = scmp.lt.s32.totalorder %s209, 1
      %s213 = scalar_select %p212, %s209, 1
      %s214 = smul.addr %s211, 2
      %s215 = sadd.s32 %s213, %s214
      %s216 = smul.addr %s215, 2
      %s217 = scalar_lea.vmem %s2, %s216
      %p218 = pneg %p103
      %p219 = pneg %p100
      %p220 = pneg %p131
      %p221 = pneg %p128
      %p222 = scmp.lt.s32.totalorder %s18, 1
      %s223 = scalar_select %p222, %s18, 1
      %p224 = scmp.lt.s32.totalorder %s19, 0
      %s225 = scalar_select %p224, %s19, 0
      %s226 = sadd.s32 %s225, %s223
      %s227 = scalar_lea.vmem %s3, %s226
      %p228 = scmp.lt.s32.totalorder %s18, 1
      %s229 = scalar_select %p228, %s18, 1
      %s230 = smul.addr %s229, 8
      %s231 = smul.addr %s230, 8
      %s232 = scalar_lea.vmem %s0, %s231
      %s233 = smul.u32 2, %s19
      %p234 = scmp.lt.s32.totalorder %s18, 1
      %s235 = scalar_select %p234, %s18, 1
      %p236 = scmp.lt.s32.totalorder %s233, 1
      %s237 = scalar_select %p236, %s233, 1
      %s238 = smul.addr %s235, 2
      %s239 = sadd.s32 %s237, %s238
      %s240 = smul.addr %s239, 4
      %s241 = scalar_lea.vmem %s1, %s240
      %s242 = smul.u32 2, %s19
      %s243 = smul.u32 2, %s19
      %p244 = scmp.lt.s32.totalorder %s18, 1
      %s245 = scalar_select %p244, %s18, 1
      %p246 = scmp.lt.s32.totalorder %s243, 1
      %s247 = scalar_select %p246, %s243, 1
      %s248 = smul.addr %s245, 2
      %s249 = sadd.s32 %s247, %s248
      %s250 = smul.addr %s249, 2
      %s251 = scalar_lea.vmem %s2, %s250
      %s252 = smul.u32 2, %s19
      %p253 = scmp.lt.s32.totalorder %s18, 1
      %s254 = scalar_select %p253, %s18, 1
      %p255 = scmp.lt.s32.totalorder %s19, 0
      %s256 = scalar_select %p255, %s19, 0
      %s257 = sadd.s32 %s256, %s254
      %s258 = scalar_lea.vmem %s3, %s257
      %v259 = vld [vmem:[%s232] sm:$0xff]
      %v260 = vld [vmem:[%s232 + $0x8] sm:$0xff]
      %v261 = vld [vmem:[%s232 + $0x10] sm:$0xff]
      %v262 = vld [vmem:[%s232 + $0x18] sm:$0xff]
      %v263 = vld [vmem:[%s232 + $0x20] sm:$0xff]
      %v264 = vld [vmem:[%s232 + $0x28] sm:$0xff]
      %v265 = vld [vmem:[%s232 + $0x30] sm:$0xff]
      %v266 = vld [vmem:[%s232 + $0x38] sm:$0xff]
      %v267 = vld [vmem:[%s241] sm:$0xff]
      %v268 = vld [vmem:[%s251] sm:$0xf]
      %v269 = vfloor.f32 %v268
      %v270 = vsub.f32 %v268, %v269
      %v271 = vcvt.f32.s32.to.zero.pseudo %v269
      %v272 = vlaneseq
      %v273 = vshrl.u32 %v272, 7
      %v274 = vadd.s32 %v273, 8
      %v275 = vperm.slane %v271, 1
      %v276 = vperm.slane %v271, 3
      %v277 = vperm.slane %v275, 1
      %v278 = vperm.slane %v276, 1
      %vm279 = vcmp.eq.s32.totalorder %v273, %v277
      %vm280 = vcmp.eq.s32.totalorder %v273, %v278
      %vm281 = vcmp.eq.s32.totalorder %v274, %v277
      %vm282 = vcmp.eq.s32.totalorder %v274, %v278
      %v283 = vsub.f32 1.0, %v270
      %v284 = vadd.s32 %v271, 1
      %v285 = vperm.slane %v284, 1
      %v286 = vperm.slane %v284, 3
      %v287 = vperm.slane %v285, 1
      %v288 = vperm.slane %v286, 1
      %vm289 = vcmp.eq.s32.totalorder %v273, %v287
      %vm290 = vcmp.eq.s32.totalorder %v273, %v288
      %vm291 = vcmp.eq.s32.totalorder %v274, %v287
      %vm292 = vcmp.eq.s32.totalorder %v274, %v288
      %v294 = vperm.slane %v270, 1
      %v295 = vperm.slane %v270, 3
      %v298 = vperm.slane %v294, 1
      %v299 = vperm.slane %v295, 1
      %v300 = vsel %vm289, %v298, 0.0
      %v301 = vsel %vm290, %v299, 0.0
      %v302 = vsel %vm291, %v298, 0.0
      %v303 = vsel %vm292, %v299, 0.0
      %v305 = vperm.slane %v283, 1
      %v306 = vperm.slane %v283, 3
      %v309 = vperm.slane %v305, 1
      %v310 = vperm.slane %v306, 1
      %v311 = vsel %vm279, %v309, %v300
      %v312 = vsel %vm280, %v310, %v301
      %v313 = vsel %vm281, %v309, %v302
      %v314 = vsel %vm282, %v310, %v303
      %v315 = vperm.slane %v271, 0
      %v316 = vperm.slane %v271, 2
      %v317 = vperm.slane %v315, 0
      %v318 = vperm.slane %v316, 0
      %vm319 = vcmp.eq.s32.totalorder %v273, %v317
      %vm320 = vcmp.eq.s32.totalorder %v273, %v318
      %vm321 = vcmp.eq.s32.totalorder %v274, %v317
      %vm322 = vcmp.eq.s32.totalorder %v274, %v318
      %v323 = vperm.slane %v284, 0
      %v324 = vperm.slane %v284, 2
      %v325 = vperm.slane %v323, 0
      %v326 = vperm.slane %v324, 0
      %vm327 = vcmp.eq.s32.totalorder %v273, %v325
      %vm328 = vcmp.eq.s32.totalorder %v273, %v326
      %vm329 = vcmp.eq.s32.totalorder %v274, %v325
      %vm330 = vcmp.eq.s32.totalorder %v274, %v326
      %v331 = vperm.slane %v270, 0
      %v332 = vperm.slane %v270, 2
      %v335 = vperm.slane %v331, 0
      %v336 = vperm.slane %v332, 0
      %v337 = vsel %vm327, %v335, 0.0
      %v338 = vsel %vm328, %v336, 0.0
      %v339 = vsel %vm329, %v335, 0.0
      %v340 = vsel %vm330, %v336, 0.0
      %v341 = vperm.slane %v283, 0
      %v342 = vperm.slane %v283, 2
      %v345 = vperm.slane %v341, 0
      %v346 = vperm.slane %v342, 0
      %v347 = vsel %vm319, %v345, %v337
      %v348 = vsel %vm320, %v346, %v338
      %v349 = vsel %vm321, %v345, %v339
      %v350 = vsel %vm322, %v346, %v340
      %vm351 = vcmask 130048
      %v353 = vsel %vm351, %v259, 0
      %v356 = vsel %vm351, %v260, 0
      %v359 = vsel %vm351, %v261, 0
      %v362 = vsel %vm351, %v262, 0
      %v365 = vsel %vm351, %v263, 0
      %v368 = vsel %vm351, %v264, 0
      %v371 = vsel %vm351, %v265, 0
      %v374 = vsel %vm351, %v266, 0
      %376 = vmatpush.msra.mxu0 0.0
      %377 = vmatpush.msra.mxu0 0.0
      %378 = vmatpush.msra.mxu0 0.0
      %379 = vmatpush.msra.mxu0 0.0
      %380 = vmatpush.msra.mxu0 0.0
      %381 = vmatpush.msra.mxu0 0.0
      %382 = vmatpush.msra.mxu0 0.0
      %383 = vmatpush.msra.mxu0 0.0
      %384 = vmatpush.msra.mxu0 0.0
      %385 = vmatpush.msra.mxu0 0.0
      %386 = vmatpush.msra.mxu0 0.0
      %387 = vmatpush.msra.mxu0 0.0
      %388 = vmatpush.msra.mxu0 0.0
      %389 = vmatpush.msra.mxu0 0.0
      %390 = vmatpush.msra.mxu0 %v313
      %391 = vmatpush.msra.mxu0 %v311
      %392 = vmatmul.f32.gmra.mxu0 %v353
      %v393 = vpop.f32.mrf.mxu0
      %v394 = vadd.f32 0.0, %v393
      %395 = vmatmul.f32.gmra.mxu0 %v356
      %v396 = vpop.f32.mrf.mxu0
      %v397 = vadd.f32 0.0, %v396
      %398 = vmatmul.f32.gmra.mxu0 %v359
      %v399 = vpop.f32.mrf.mxu0
      %v400 = vadd.f32 0.0, %v399
      %401 = vmatmul.f32.gmra.mxu0 %v362
      %v402 = vpop.f32.mrf.mxu0
      %v403 = vadd.f32 0.0, %v402
      %404 = vmatmul.f32.gmra.mxu0 %v365
      %v405 = vpop.f32.mrf.mxu0
      %v406 = vadd.f32 0.0, %v405
      %407 = vmatmul.f32.gmra.mxu0 %v368
      %v408 = vpop.f32.mrf.mxu0
      %v409 = vadd.f32 0.0, %v408
      %410 = vmatmul.f32.gmra.mxu0 %v371
      %v411 = vpop.f32.mrf.mxu0
      %v412 = vadd.f32 0.0, %v411
      %413 = vmatmul.f32.gmra.mxu0 %v374
      %v414 = vpop.f32.mrf.mxu0
      %v415 = vadd.f32 0.0, %v414
      %416 = vdwg.mxu0
      %417 = vmatpush.msra.mxu0 0.0
      %418 = vmatpush.msra.mxu0 0.0
      %419 = vmatpush.msra.mxu0 0.0
      %420 = vmatpush.msra.mxu0 0.0
      %421 = vmatpush.msra.mxu0 0.0
      %422 = vmatpush.msra.mxu0 0.0
      %423 = vmatpush.msra.mxu0 0.0
      %424 = vmatpush.msra.mxu0 0.0
      %425 = vmatpush.msra.mxu0 0.0
      %426 = vmatpush.msra.mxu0 0.0
      %427 = vmatpush.msra.mxu0 0.0
      %428 = vmatpush.msra.mxu0 0.0
      %429 = vmatpush.msra.mxu0 0.0
      %430 = vmatpush.msra.mxu0 0.0
      %431 = vmatpush.msra.mxu0 %v314
      %432 = vmatpush.msra.mxu0 %v312
      %433 = vmatmul.f32.gmra.mxu0 %v353
      %v434 = vpop.f32.mrf.mxu0
      %v435 = vadd.f32 0.0, %v434
      %436 = vmatmul.f32.gmra.mxu0 %v356
      %v437 = vpop.f32.mrf.mxu0
      %v438 = vadd.f32 0.0, %v437
      %439 = vmatmul.f32.gmra.mxu0 %v359
      %v440 = vpop.f32.mrf.mxu0
      %v441 = vadd.f32 0.0, %v440
      %442 = vmatmul.f32.gmra.mxu0 %v362
      %v443 = vpop.f32.mrf.mxu0
      %v444 = vadd.f32 0.0, %v443
      %445 = vmatmul.f32.gmra.mxu0 %v365
      %v446 = vpop.f32.mrf.mxu0
      %v447 = vadd.f32 0.0, %v446
      %448 = vmatmul.f32.gmra.mxu0 %v368
      %v449 = vpop.f32.mrf.mxu0
      %v450 = vadd.f32 0.0, %v449
      %451 = vmatmul.f32.gmra.mxu0 %v371
      %v452 = vpop.f32.mrf.mxu0
      %v453 = vadd.f32 0.0, %v452
      %454 = vmatmul.f32.gmra.mxu0 %v374
      %v455 = vpop.f32.mrf.mxu0
      %v456 = vadd.f32 0.0, %v455
      %457 = vdwg.mxu0
      %v458 = vmul.f32 %v394, %v347
      %v459 = vmul.f32 %v435, %v348
      %v460 = vmul.f32 %v397, %v349
      %v461 = vmul.f32 %v438, %v350
      %v462 = vmul.f32 %v400, %v347
      %v463 = vmul.f32 %v441, %v348
      %v464 = vmul.f32 %v403, %v349
      %v465 = vmul.f32 %v444, %v350
      %v466 = vmul.f32 %v406, %v347
      %v467 = vmul.f32 %v447, %v348
      %v468 = vmul.f32 %v409, %v349
      %v469 = vmul.f32 %v450, %v350
      %v470 = vmul.f32 %v412, %v347
      %v471 = vmul.f32 %v453, %v348
      %v472 = vmul.f32 %v415, %v349
      %v473 = vmul.f32 %v456, %v350
      %v474 = vadd.f32 %v458, %v460
      %v475 = vrot.slane %v474, 4
      %v476 = vadd.f32 %v474, %v475
      %v477 = vrot.slane %v476, 2
      %v478 = vadd.f32 %v476, %v477
      %v479 = vrot.slane %v478, 1
      %v480 = vadd.f32 %v478, %v479
      %v481 = vadd.f32 %v459, %v461
      %v482 = vrot.slane %v481, 4
      %v483 = vadd.f32 %v481, %v482
      %v484 = vrot.slane %v483, 2
      %v485 = vadd.f32 %v483, %v484
      %v486 = vrot.slane %v485, 1
      %v487 = vadd.f32 %v485, %v486
      %v488 = vadd.f32 %v462, %v464
      %v489 = vrot.slane %v488, 4
      %v490 = vadd.f32 %v488, %v489
      %v491 = vrot.slane %v490, 2
      %v492 = vadd.f32 %v490, %v491
      %v493 = vrot.slane %v492, 1
      %v494 = vadd.f32 %v492, %v493
      %v495 = vadd.f32 %v463, %v465
      %v496 = vrot.slane %v495, 4
      %v497 = vadd.f32 %v495, %v496
      %v498 = vrot.slane %v497, 2
      %v499 = vadd.f32 %v497, %v498
      %v500 = vrot.slane %v499, 1
      %v501 = vadd.f32 %v499, %v500
      %v502 = vadd.f32 %v466, %v468
      %v503 = vrot.slane %v502, 4
      %v504 = vadd.f32 %v502, %v503
      %v505 = vrot.slane %v504, 2
      %v506 = vadd.f32 %v504, %v505
      %v507 = vrot.slane %v506, 1
      %v508 = vadd.f32 %v506, %v507
      %v509 = vadd.f32 %v467, %v469
      %v510 = vrot.slane %v509, 4
      %v511 = vadd.f32 %v509, %v510
      %v512 = vrot.slane %v511, 2
      %v513 = vadd.f32 %v511, %v512
      %v514 = vrot.slane %v513, 1
      %v515 = vadd.f32 %v513, %v514
      %v516 = vadd.f32 %v470, %v472
      %v517 = vrot.slane %v516, 4
      %v518 = vadd.f32 %v516, %v517
      %v519 = vrot.slane %v518, 2
      %v520 = vadd.f32 %v518, %v519
      %v521 = vrot.slane %v520, 1
      %v522 = vadd.f32 %v520, %v521
      %v523 = vadd.f32 %v471, %v473
      %v524 = vrot.slane %v523, 4
      %v525 = vadd.f32 %v523, %v524
      %v526 = vrot.slane %v525, 2
      %v527 = vadd.f32 %v525, %v526
      %v528 = vrot.slane %v527, 1
      %v529 = vadd.f32 %v527, %v528
      %531 = vst [vmem:[#allocation1] ss:$2 sm:$0xff] %v267
      %v532 = vld.sshfl [vmem:[#allocation1] sm:$0xff pattern:$0x75316420]
      %v533 = vld.sshfl [vmem:[#allocation1 + $0x8] sm:$0xff pattern:$0x75316420]
      %v534 = vrot.slane %v532, 1
      %v535 = vrot.slane %v533, 1
      %v536 = vrot.slane %v532, 2
      %v537 = vrot.slane %v533, 2
      %v538 = vrot.slane %v532, 3
      %v539 = vrot.slane %v533, 3
      %v548 = vsub.f32 %v480, %v532
      %v549 = vsub.f32 %v487, %v533
      %v550 = vsub.f32 %v494, %v534
      %v551 = vsub.f32 %v501, %v535
      %v552 = vsub.f32 %v508, %v536
      %v553 = vsub.f32 %v515, %v537
      %v554 = vsub.f32 %v522, %v538
      %v555 = vsub.f32 %v529, %v539
      %v556 = vmul.f32 %v548, %v548
      %v557 = vmul.f32 %v549, %v549
      %v558 = vmul.f32 %v550, %v550
      %v559 = vmul.f32 %v551, %v551
      %v560 = vmul.f32 %v552, %v552
      %v561 = vmul.f32 %v553, %v553
      %v562 = vmul.f32 %v554, %v554
      %v563 = vmul.f32 %v555, %v555
      %v572 = vrot.slane %v558, 7
      %vm573 = vcmask 1041409
      %v574 = vsel %vm573, %v572, %v556
      %v575 = vrot.slane %v560, 6
      %vm576 = vcmask 1042434
      %v577 = vsel %vm576, %v575, %v574
      %v578 = vrot.slane %v562, 5
      %vm579 = vcmask 1043459
      %v580 = vsel %vm579, %v578, %v577
      %v581 = vrot.slane %v559, 7
      %v582 = vsel %vm573, %v581, %v557
      %v583 = vrot.slane %v561, 6
      %v584 = vsel %vm576, %v583, %v582
      %v585 = vrot.slane %v563, 5
      %v586 = vsel %vm579, %v585, %v584
      %vm589 = vcmask 1043456
      %v590 = vsel %vm589, %v580, 0.0
      %v591 = vsel %vm589, %v586, 0.0
      %v592 = vadd.f32 %v590, %v591
      %593 = vadd.xlane.f32.xlu0 %v592
      %v594 = vpop.xlane.xlu0 %593
      %v595 = vrot.slane %v594, 4
      %v596 = vadd.f32 %v594, %v595
      %v597 = vrot.slane %v596, 2
      %v598 = vadd.f32 %v596, %v597
      %v599 = vrot.slane %v598, 1
      %v600 = vadd.f32 %v598, %v599
      %s601 = vtos %v600
      %v602 = vstv %s601
      %vm603 = vcmask 0
      %604 = vst.msk [vmem:[%s258] sm:$0x1] %vm603, %v602
      %p605 = scmp.lt.s32.totalorder %s18, 1
      %s606 = scalar_select %p605, %s18, 1
      %p607 = scmp.lt.s32.totalorder %s19, 0
      %s608 = scalar_select %p607, %s19, 0
      %s609 = sadd.s32 %s608, %s606
      %s610 = scalar_lea.vmem %s3, %s609
      // Predicated region
      $region33: #{tpu_custom_call.1} parent=31 // pred_check
        %p611 = pneg %p128
      $region34: #{tpu_custom_call.1} parent=31 // pred_check_branch
        %613 = sbr.rel (%p611) target = $region36
      $region35: #{tpu_custom_call.1} parent=31 // pred_region
        _
      $region36: #{tpu_custom_call.1} parent=31 // pred_fallthru
        _
    $region32: #{tpu_custom_call.1} parent=5 // pred_fallthru
      _
    %p614 = scmp.le.s32.totalorder 2, %s9
    // Predicated region
    $region37: #{tpu_custom_call.1} parent=5 // pred_check
      %p615 = pneg %p614
    $region38: #{tpu_custom_call.1} parent=5 // pred_check_branch
      %617 = sbr.rel (%p615) target = $region40
    $region39: #{tpu_custom_call.1} parent=5 // pred_region
      %s618 = ssub.s32 %s9, 2
      // Predicated region
      $region41: #{tpu_custom_call.1} parent=39 // pred_check
        %p619 = pneg %p134
      $region42: #{tpu_custom_call.1} parent=39 // pred_check_branch
        %621 = sbr.rel (%p619) target = $region44
      $region43: #{tpu_custom_call.1} parent=39 // pred_region
        %p622 = scmp.lt.s32.totalorder %s20, 1
        %s623 = scalar_select %p622, %s20, 1
        %p624 = scmp.lt.s32.totalorder %s21, 0
        %s625 = scalar_select %p624, %s21, 0
        %s626 = sadd.s32 %s625, %s623
        %s627 = scalar_lea.vmem %s3, %s626
      $region44: #{tpu_custom_call.1} parent=39 // pred_fallthru
        _
    $region40: #{tpu_custom_call.1} parent=5 // pred_fallthru
      _
  $region6: #{tpu_custom_call.1} parent=0 // loop_footer
    %s13 = sadd.s32 1, %s9
  $region7: #{tpu_custom_call.1} parent=0 // loop_footer_branch
    %8 = sbr.rel target = $region3
  $region8: #{tpu_custom_call.1} parent=0 // loop_exit
    _

</llo_original>
